<compile_context>
chip_gen: v7x
topology: tpu7x:2x2x1
jax: 0.10.0
libtpu: 0.0.40
codegen_flags: <defaults>
</compile_context>

<pallas_src>
import jax
import jax.numpy as jnp
from jax.experimental import pallas as pl
from jax.experimental.pallas import tpu as pltpu


# (M=1, K=H) x (N=TILE_B, K=H)^T contraction: contract the last dim of both
# operands (same "A @ B^T" form as flash-attention's Q K^T).
_NT_DIM_NUMBERS = (((1,), (1,)), ((), ()))


def _discriminator_kernel(x_ref, w_ref, b_ref, o_ref):
    # x_ref: (TILE_B, H) VMEM        w_ref: (1, H) VMEM (constant index map)
    # b_ref: (1, 1)   SMEM scalar    o_ref: (1, TILE_B) VMEM (lane-dense)
    z = jax.lax.dot_general(
        w_ref[...], x_ref[...], _NT_DIM_NUMBERS,
        preferred_element_type=jnp.float32)            # (1, TILE_B)
    z = z + b_ref[0, 0]                                # scalar bias from SMEM
    o_ref[...] = jax.nn.sigmoid(z).astype(o_ref.dtype)


def _pick_tile_b(B, H):
    """Largest useful batch tile: multiple of 128, single step for small B,
    bounded by a conservative per-step VMEM budget for large B."""
    b_round = ((B + 127) // 128) * 128
    # Per-step VMEM ~= 2 * tile_b * H * 4 bytes (double-buffered x tile) plus
    # small weight/output blocks; keep it well under the scoped VMEM limit.
    vmem_budget = 8 * 1024 * 1024
    cap = max(128, (vmem_budget // (8 * max(H, 1))) // 128 * 128)
    return min(b_round, cap, 2048)


def discriminator_forward(x, w1, b1, w2, b2, *, tile_b=None):
    """Forward pass of the Discriminator.

    x : (B, hidden)   w1: (hidden, 128)   b1: (1, 128)   w2: (128, 1)   b2: (1, 1)
    Returns (B, 1) float32 sigmoid outputs (same semantics as the torch module).
    """
    B, H = x.shape
    hp = jax.lax.Precision.HIGHEST

    # --- Fuse the two linear layers (exact up to f32 rounding). -------------
    w_fused = jnp.dot(w1, w2, precision=hp).reshape(1, H)            # (1, H)
    b_fused = (jnp.dot(b1, w2, precision=hp) + b2).reshape(1, 1)     # (1, 1)

    # --- Batch tiling. -------------------------------------------------------
    if tile_b is None:
        tile_b = _pick_tile_b(B, H)
    num_tiles = (B + tile_b - 1) // tile_b
    b_padded = num_tiles * tile_b
    if b_padded != B:
        x = jnp.pad(x, ((0, b_padded - B), (0, 0)))

    out_row = pl.pallas_call(
        _discriminator_kernel,
        out_shape=jax.ShapeDtypeStruct((1, b_padded), jnp.float32),
        grid=(num_tiles,),
        in_specs=[
            pl.BlockSpec((tile_b, H), lambda i: (i, 0)),        # x batch tile
            pl.BlockSpec((1, H), lambda i: (0, 0)),             # fused weight
            pl.BlockSpec(memory_space=pltpu.MemorySpace.SMEM),  # fused bias
        ],
        out_specs=pl.BlockSpec((1, tile_b), lambda i: (0, i)),  # lane-dense row
        compiler_params=pltpu.CompilerParams(
            dimension_semantics=("parallel",),   # shard batch axis across TCs
            vmem_limit_bytes=32 * 1024 * 1024,
        ),
    )(x, w_fused, b_fused)

    # (1, B_padded) lane-dense slab -> (B, 1) column, dropping padded rows.
    return out_row.reshape(b_padded, 1)[:B]


def _reference(x, w1, b1, w2, b2):
    h = x @ w1 + b1
    z = h @ w2 + b2
    return jax.nn.sigmoid(z)


if __name__ == "__main__":
    # Shapes consistent with the module: config.hidden_size=32,
    # inter_hidden_size=128 (fixed by the module), num_domains=2 -> out dim 1.
    # batch=200 exercises the pad-to-tile path (padded to 256, single tile).
    batch = 200
    hidden_size = 32
    inter_hidden_size = 128
    out_dim = 1  # num_domains - 1

    key = jax.random.PRNGKey(0)
    k_x, k_w1, k_b1, k_w2, k_b2 = jax.random.split(key, 5)

    x = jax.random.normal(k_x, (batch, hidden_size), dtype=jnp.float32)

    # Deterministic parameter init (uniform, roughly torch's default scale).
    lim1 = 1.0 / (hidden_size ** 0.5)
    lim2 = 1.0 / (inter_hidden_size ** 0.5)
    w1 = jax.random.uniform(k_w1, (hidden_size, inter_hidden_size),
                            minval=-lim1, maxval=lim1, dtype=jnp.float32)
    b1 = jax.random.uniform(k_b1, (1, inter_hidden_size),
                            minval=-lim1, maxval=lim1, dtype=jnp.float32)
    w2 = jax.random.uniform(k_w2, (inter_hidden_size, out_dim),
                            minval=-lim2, maxval=lim2, dtype=jnp.float32)
    b2 = jax.random.uniform(k_b2, (1, out_dim),
                            minval=-lim2, maxval=lim2, dtype=jnp.float32)

    fwd = jax.jit(discriminator_forward)
    out = jax.block_until_ready(fwd(x, w1, b1, w2, b2))

    ref = _reference(x, w1, b1, w2, b2)
    assert out.shape == (batch, out_dim), out.shape
    assert jnp.allclose(out, ref, atol=1e-5, rtol=1e-5), "mismatch vs reference"

    print("KERNEL_OK")
</pallas_src>

<mosaic_0001>
module attributes {stable_mosaic.version = 11 : i64} {
  func.func @_discriminator_kernel(%arg0: i32, %arg1: memref<256x32xf32, #tpu.memory_space<vmem>>, %arg2: memref<1x32xf32, #tpu.memory_space<vmem>>, %arg3: memref<1x1xf32, #tpu.memory_space<smem>>, %arg4: memref<1x256xf32, #tpu.memory_space<vmem>>) attributes {dimension_semantics = [#tpu.dimension_semantics<parallel>], iteration_bounds = array<i64: 1>, scalar_prefetch = 0 : i64, scratch_operands = 0 : i64, tpu.core_type = #tpu.core_type<tc>, window_params = [{transform_indices = @transform_0, window_bounds = array<i64: 256, 32>}, {pipeline_mode = #tpu.pipeline_mode<synchronous>, transform_indices = @transform_1, window_bounds = array<i64: 1, 32>}, {transform_indices = @transform_2, window_bounds = array<i64: 1, 1>}, {transform_indices = @transform_3, window_bounds = array<i64: 1, 256>}]} {
    %c0 = arith.constant 0 : index
    %c0_0 = arith.constant 0 : index
    %0 = vector.load %arg2[%c0, %c0_0] : memref<1x32xf32, #tpu.memory_space<vmem>>, vector<1x32xf32>
    %c0_1 = arith.constant 0 : index
    %c0_2 = arith.constant 0 : index
    %1 = vector.load %arg1[%c0_1, %c0_2] : memref<256x32xf32, #tpu.memory_space<vmem>>, vector<256x32xf32>
    %cst = arith.constant dense<0.000000e+00> : vector<1x256xf32>
    %2 = tpu.matmul %0, %1, %cst {dimension_numbers = #tpu.dot_dimension_numbers<[1], [1], [0], [0], [0, 0, 1, 0], [], []>} : vector<1x32xf32>, vector<256x32xf32>, vector<1x256xf32> -> vector<1x256xf32>
    %c0_3 = arith.constant 0 : index
    %c0_4 = arith.constant 0 : index
    %3 = memref.load %arg3[%c0_3, %c0_4] : memref<1x1xf32, #tpu.memory_space<smem>>
    %4 = vector.broadcast %3 : f32 to vector<1x256xf32>
    %5 = arith.addf %2, %4 : vector<1x256xf32>
    %6 = arith.negf %5 : vector<1x256xf32>
    %7 = math.exp %6 : vector<1x256xf32>
    %cst_5 = arith.constant 1.000000e+00 : f32
    %8 = vector.broadcast %cst_5 : f32 to vector<1x256xf32>
    %9 = arith.addf %8, %7 : vector<1x256xf32>
    %10 = arith.divf %8, %9 : vector<1x256xf32>
    %c0_6 = arith.constant 0 : index
    %c0_7 = arith.constant 0 : index
    %11 = vector.load %arg4[%c0_6, %c0_7] : memref<1x256xf32, #tpu.memory_space<vmem>>, vector<1x256xf32>
    tpu.vector_store %arg4[%c0_6, %c0_7], %10 {strides = array<i32>} : memref<1x256xf32, #tpu.memory_space<vmem>>, vector<1x256xf32>,
    return
  }
  func.func @transform_0(%arg0: i32) -> (i32, i32) {
    %c0_i32 = arith.constant 0 : i32
    %c0_i32_0 = arith.constant 0 : i32
    return %arg0, %c0_i32 : i32, i32
  }
  func.func @transform_1(%arg0: i32) -> (i32, i32) {
    %c0_i32 = arith.constant 0 : i32
    %c0_i32_0 = arith.constant 0 : i32
    %c0_i32_1 = arith.constant 0 : i32
    return %c0_i32, %c0_i32_0 : i32, i32
  }
  func.func @transform_2(%arg0: i32) -> (i32, i32) {
    %c0_i32 = arith.constant 0 : i32
    %c0_i32_0 = arith.constant 0 : i32
    %c0_i32_1 = arith.constant 0 : i32
    return %c0_i32, %c0_i32_0 : i32, i32
  }
  func.func @transform_3(%arg0: i32) -> (i32, i32) {
    %c0_i32 = arith.constant 0 : i32
    %c0_i32_0 = arith.constant 0 : i32
    return %c0_i32, %arg0 : i32, i32
  }
}

</mosaic_0001>

<llo_original>
// kernel: discriminator_forward.1
$region0: #{discriminator_forward.1}
  #allocation0 [shape = 'u32[]', space=smem, size = 0x4, offset = 0x4, fixed_abs, tag = 'smem constant byte address 0x4 - core index']
  #allocation1 [shape = 'u32[144,128]{1,0:T(1,128)}', space=vmem, size = 0x12000, scoped, tag = 'internal scratch']
  #allocation2 [shape = 'f32[1,1]{1,0:T(1,128)S(6)}', space=smem, size = 0x200, scoped, tag = 'scoped memory for discriminator_forward.1']
  %s0 = inlined_call_operand.vmem [shape: f32[256,32], index: 0, kind: input, shape index: {}]
  %s1 = inlined_call_operand.vmem [shape: f32[1,32], index: 1, kind: input, shape index: {}]
  %s2 = inlined_call_operand.<no memory space> [shape: f32[1,1], index: 2, kind: input, shape index: {}]
  %s3 = inlined_call_operand.vmem [shape: f32[1,256], index: 3, kind: output, shape index: {}]
  %s4 = sld [smem:[#allocation0]]
  $region22: #{discriminator_forward.1} parent=0
    _
  %s6 = ssub.s32 1, %s4
  %s7 = scalar_select 0, %s6, %s4
  %8 = sst [smem:[#allocation2]] %s2
  // Predicated region
  $region2: #{discriminator_forward.1} parent=0 // pred_check
    _
  $region3: #{discriminator_forward.1} parent=0 // pred_check_branch
    %10 = sbr.rel (0) target = $region5
  $region4: #{discriminator_forward.1} parent=0 // pred_region
    _
  $region5: #{discriminator_forward.1} parent=0 // pred_fallthru
    _
  // Predicated region
  $region6: #{discriminator_forward.1} parent=0 // pred_check
    _
  $region7: #{discriminator_forward.1} parent=0 // pred_check_branch
    %12 = sbr.rel (0) target = $region9
  $region8: #{discriminator_forward.1} parent=0 // pred_region
    _
  $region9: #{discriminator_forward.1} parent=0 // pred_fallthru
    _
  // Predicated region
  $region10: #{discriminator_forward.1} parent=0 // pred_check
    _
  $region11: #{discriminator_forward.1} parent=0 // pred_check_branch
    %14 = sbr.rel (0) target = $region13
  $region12: #{discriminator_forward.1} parent=0 // pred_region
    _
  $region13: #{discriminator_forward.1} parent=0 // pred_fallthru
    _
  %v15 = vld [vmem:[%s1] sm:$0x1]
  %v16 = vld [vmem:[%s0] sm:$0xff]
  %v17 = vld [vmem:[%s0 + $0x8] sm:$0xff]
  %v18 = vld [vmem:[%s0 + $0x10] sm:$0xff]
  %v19 = vld [vmem:[%s0 + $0x18] sm:$0xff]
  %v20 = vld [vmem:[%s0 + $0x20] sm:$0xff]
  %v21 = vld [vmem:[%s0 + $0x28] sm:$0xff]
  %v22 = vld [vmem:[%s0 + $0x30] sm:$0xff]
  %v23 = vld [vmem:[%s0 + $0x38] sm:$0xff]
  %v24 = vld [vmem:[%s0 + $0x40] sm:$0xff]
  %v25 = vld [vmem:[%s0 + $0x48] sm:$0xff]
  %v26 = vld [vmem:[%s0 + $0x50] sm:$0xff]
  %v27 = vld [vmem:[%s0 + $0x58] sm:$0xff]
  %v28 = vld [vmem:[%s0 + $0x60] sm:$0xff]
  %v29 = vld [vmem:[%s0 + $0x68] sm:$0xff]
  %v30 = vld [vmem:[%s0 + $0x70] sm:$0xff]
  %v31 = vld [vmem:[%s0 + $0x78] sm:$0xff]
  %v32 = vld [vmem:[%s0 + $0x80] sm:$0xff]
  %v33 = vld [vmem:[%s0 + $0x88] sm:$0xff]
  %v34 = vld [vmem:[%s0 + $0x90] sm:$0xff]
  %v35 = vld [vmem:[%s0 + $0x98] sm:$0xff]
  %v36 = vld [vmem:[%s0 + $0xa0] sm:$0xff]
  %v37 = vld [vmem:[%s0 + $0xa8] sm:$0xff]
  %v38 = vld [vmem:[%s0 + $0xb0] sm:$0xff]
  %v39 = vld [vmem:[%s0 + $0xb8] sm:$0xff]
  %v40 = vld [vmem:[%s0 + $0xc0] sm:$0xff]
  %v41 = vld [vmem:[%s0 + $0xc8] sm:$0xff]
  %v42 = vld [vmem:[%s0 + $0xd0] sm:$0xff]
  %v43 = vld [vmem:[%s0 + $0xd8] sm:$0xff]
  %v44 = vld [vmem:[%s0 + $0xe0] sm:$0xff]
  %v45 = vld [vmem:[%s0 + $0xe8] sm:$0xff]
  %v46 = vld [vmem:[%s0 + $0xf0] sm:$0xff]
  %v47 = vld [vmem:[%s0 + $0xf8] sm:$0xff]
  %s48 = sld [smem:[#allocation2]]
  %v49 = vstv %s48
  %vm50 = vcmask 261120
  %v52 = vsel %vm50, %v15, 0
  %v55 = vsel %vm50, %v16, 0
  %v58 = vsel %vm50, %v17, 0
  %v61 = vsel %vm50, %v18, 0
  %v64 = vsel %vm50, %v19, 0
  %v67 = vsel %vm50, %v20, 0
  %v70 = vsel %vm50, %v21, 0
  %v73 = vsel %vm50, %v22, 0
  %v76 = vsel %vm50, %v23, 0
  %v79 = vsel %vm50, %v24, 0
  %v82 = vsel %vm50, %v25, 0
  %v85 = vsel %vm50, %v26, 0
  %v88 = vsel %vm50, %v27, 0
  %v91 = vsel %vm50, %v28, 0
  %v94 = vsel %vm50, %v29, 0
  %v97 = vsel %vm50, %v30, 0
  %v100 = vsel %vm50, %v31, 0
  %v103 = vsel %vm50, %v32, 0
  %v106 = vsel %vm50, %v33, 0
  %v109 = vsel %vm50, %v34, 0
  %v112 = vsel %vm50, %v35, 0
  %v115 = vsel %vm50, %v36, 0
  %v118 = vsel %vm50, %v37, 0
  %v121 = vsel %vm50, %v38, 0
  %v124 = vsel %vm50, %v39, 0
  %v127 = vsel %vm50, %v40, 0
  %v130 = vsel %vm50, %v41, 0
  %v133 = vsel %vm50, %v42, 0
  %v136 = vsel %vm50, %v43, 0
  %v139 = vsel %vm50, %v44, 0
  %v142 = vsel %vm50, %v45, 0
  %v145 = vsel %vm50, %v46, 0
  %v148 = vsel %vm50, %v47, 0
  %150 = vmatprep.subr.mxu0 0.0
  %151 = vmatpush1.xpose.msra.mxu0 %v55
  %152 = vmatprep.subr.mxu0 0.0
  %153 = vmatpush1.xpose.msra.mxu0 %v58
  %154 = vmatprep.subr.mxu0 0.0
  %155 = vmatpush1.xpose.msra.mxu0 %v61
  %156 = vmatprep.subr.mxu0 0.0
  %157 = vmatpush1.xpose.msra.mxu0 %v64
  %158 = vmatprep.subr.mxu0 0.0
  %159 = vmatpush1.xpose.msra.mxu0 %v67
  %160 = vmatprep.subr.mxu0 0.0
  %161 = vmatpush1.xpose.msra.mxu0 %v70
  %162 = vmatprep.subr.mxu0 0.0
  %163 = vmatpush1.xpose.msra.mxu0 %v73
  %164 = vmatprep.subr.mxu0 0.0
  %165 = vmatpush1.xpose.msra.mxu0 %v76
  %166 = vmatprep.subr.mxu0 0.0
  %167 = vmatpush1.xpose.msra.mxu0 %v79
  %168 = vmatprep.subr.mxu0 0.0
  %169 = vmatpush1.xpose.msra.mxu0 %v82
  %170 = vmatprep.subr.mxu0 0.0
  %171 = vmatpush1.xpose.msra.mxu0 %v85
  %172 = vmatprep.subr.mxu0 0.0
  %173 = vmatpush1.xpose.msra.mxu0 %v88
  %174 = vmatprep.subr.mxu0 0.0
  %175 = vmatpush1.xpose.msra.mxu0 %v91
  %176 = vmatprep.subr.mxu0 0.0
  %177 = vmatpush1.xpose.msra.mxu0 %v94
  %178 = vmatprep.subr.mxu0 0.0
  %179 = vmatpush1.xpose.msra.mxu0 %v97
  %180 = vmatprep.subr.mxu0 0.0
  %181 = vmatpush1.xpose.msra.mxu0 %v100
  %182 = vmatprep.subr.mxu0 0.0
  %183 = vmatpush1.xpose.msra.mxu0 %v103
  %184 = vmatprep.subr.mxu0 0.0
  %185 = vmatpush1.xpose.msra.mxu0 %v106
  %186 = vmatprep.subr.mxu0 0.0
  %187 = vmatpush1.xpose.msra.mxu0 %v109
  %188 = vmatprep.subr.mxu0 0.0
  %189 = vmatpush1.xpose.msra.mxu0 %v112
  %190 = vmatprep.subr.mxu0 0.0
  %191 = vmatpush1.xpose.msra.mxu0 %v115
  %192 = vmatprep.subr.mxu0 0.0
  %193 = vmatpush1.xpose.msra.mxu0 %v118
  %194 = vmatprep.subr.mxu0 0.0
  %195 = vmatpush1.xpose.msra.mxu0 %v121
  %196 = vmatprep.subr.mxu0 0.0
  %197 = vmatpush1.xpose.msra.mxu0 %v124
  %198 = vmatprep.subr.mxu0 0.0
  %199 = vmatpush1.xpose.msra.mxu0 %v127
  %200 = vmatprep.subr.mxu0 0.0
  %201 = vmatpush1.xpose.msra.mxu0 %v130
  %202 = vmatprep.subr.mxu0 0.0
  %203 = vmatpush1.xpose.msra.mxu0 %v133
  %204 = vmatprep.subr.mxu0 0.0
  %205 = vmatpush1.xpose.msra.mxu0 %v136
  %206 = vmatprep.subr.mxu0 0.0
  %207 = vmatpush1.xpose.msra.mxu0 %v139
  %208 = vmatprep.subr.mxu0 0.0
  %209 = vmatpush1.xpose.msra.mxu0 %v142
  %210 = vmatprep.subr.mxu0 0.0
  %211 = vmatpush1.xpose.msra.mxu0 %v145
  %212 = vmatprep.subr.mxu0 0.0
  %213 = vmatpush1.xpose.msra.mxu0 %v148
  %214 = vmatprep.mubr.f32.mxu0 0.0
  %215 = vmatmul.mubr.f32.gmra.mrb[0].mxu0 %v52
  %v216 = vpop.f32.mrb[0].mxu0
  %v217 = vadd.f32 %v49, %v216
  %v218 = vpop.f32.mrb[0].mxu0
  %v219 = vadd.f32 %v49, %v218
  %220 = vdwg.mxu0
  %v221 = vxor.u32 %v217, 2147483648
  %v222 = vxor.u32 %v219, 2147483648
  %v223 = vmul.f32 %v221, 1.442695
  %v224 = vpow.pop %v223
  %v225 = vmul.f32 %v222, 1.442695
  %v226 = vpow.pop %v225
  %v227 = vadd.f32 %v224, 1.0
  %v228 = vadd.f32 %v226, 1.0
  %v229 = vrcp.pop %v227
  %v230 = vmul.f32 1.0, %v229
  %v231 = vrcp.pop %v228
  %v232 = vmul.f32 1.0, %v231
  %v235 = vcombine.low %v230, %v232
  %v237 = vunpack.c.l.s4 1966171168
  %v238 = vunpack.c.0.s8 %v237
  %v239 = vlaneseq
  %v240 = vshrl.u32 %v239, 7
  %v241 = vsub.s32 %v238, %v240
  %v242 = vrot.slane %v235, %v241
  %v244 = vunpack.c.l.s4 1966171168
  %v245 = vunpack.c.0.s8 %v244
  %v246 = vlaneseq
  %v247 = vshrl.u32 %v246, 7
  %v248 = vsub.s32 %v245, %v247
  %v249 = vrot.slane %v242, %v248
  %v251 = vlaneseq
  %vm252 = vcmp.ge.s32.totalorder %v251, 0
  %vm253 = vcmp.lt.s32.totalorder %v251, 256
  %vm254 = vmand %vm252, %vm253
  %255 = vst.msk [vmem:[%s3] sm:$0x3] %vm254, %v249
  // Predicated region
  $region14: #{discriminator_forward.1} parent=0 // pred_check
    _
  $region15: #{discriminator_forward.1} parent=0 // pred_check_branch
    %257 = sbr.rel (0) target = $region17
  $region16: #{discriminator_forward.1} parent=0 // pred_region
    _
  $region17: #{discriminator_forward.1} parent=0 // pred_fallthru
    _
  // Predicated region
  $region18: #{discriminator_forward.1} parent=0 // pred_check
    _
  $region19: #{discriminator_forward.1} parent=0 // pred_check_branch
    %259 = sbr.rel (0) target = $region21
  $region20: #{discriminator_forward.1} parent=0 // pred_region
    _
  $region21: #{discriminator_forward.1} parent=0 // pred_fallthru
    _

</llo_original>
